<compile_context>
chip_gen: v7x
topology: tpu7x:2x2x1
jax: 0.10.0
libtpu: 0.0.40
codegen_flags: <defaults>
</compile_context>

<pallas_src>
import functools

import jax
import jax.numpy as jnp
import numpy as np
from jax import lax
from jax.experimental import pallas as pl
from jax.experimental.pallas import tpu as pltpu


# ---------------------------------------------------------------------------
# Parameter / buffer construction (deterministic, mirrors the PyTorch __init__)
# ---------------------------------------------------------------------------
def make_positional_encoding_table(d_model: int, max_len: int = 5000) -> jnp.ndarray:
    """Builds the `pe` buffer exactly like the PyTorch module: (max_len, 1, d_model)."""
    position = np.arange(0, max_len, dtype=np.float32)[:, None]                    # (L, 1)
    div_term = np.exp(np.arange(0, d_model, 2, dtype=np.float32)
                      * (-np.log(10000.0) / d_model))                              # (d/2,)
    pe = np.zeros((max_len, d_model), dtype=np.float32)
    pe[:, 0::2] = np.sin(position * div_term)
    pe[:, 1::2] = np.cos(position * div_term)
    pe = pe[:, None, :]                                                             # (L, 1, d)
    return jnp.asarray(pe)


# ---------------------------------------------------------------------------
# Pallas kernel: fused (x + pe) elementwise add  +  (inverted) dropout
# ---------------------------------------------------------------------------
# murmur3-style finalizer constants, written as signed int32 values.
_HASH_SEED_MULT = -1640531527    # 0x9E3779B9
_HASH_C1 = -2048144789           # 0x85EBCA6B
_HASH_C2 = -1028477387           # 0xC2B2AE35


def _repeat_lanes(t, reps: int):
    """Repeat `t` along its last (lane) axis `reps` times via O(log reps) concats."""
    assert reps >= 1
    out = None
    piece = t
    r = reps
    while r:
        if r & 1:
            out = piece if out is None else jnp.concatenate([out, piece], axis=-1)
        r >>= 1
        if r:
            piece = jnp.concatenate([piece, piece], axis=-1)
    return out


def _pe_dropout_kernel(seed_ref, x_ref, pe_ref, o_ref, *,
                       p: float, training: bool, batch: int):
    x = x_ref[...]                                   # (tS, B*D)   lane-dense
    pe = pe_ref[...]                                 # (tS, D)
    y = x + _repeat_lanes(pe, batch)                 # broadcast pe over batch (lanes)

    if training and p > 0.0:
        tS, W = x_ref.shape                          # W = B*D

        # Global element index (counter): unique per element, per tile.
        rows = lax.broadcasted_iota(jnp.int32, (tS, W), 0) + pl.program_id(0) * tS
        cols = lax.broadcasted_iota(jnp.int32, (tS, W), 1)
        gid = rows * jnp.int32(W) + cols

        # Counter-based hash (wrapping int32 arithmetic; logical shifts).
        h = gid ^ (seed_ref[0] * jnp.int32(_HASH_SEED_MULT))
        h = h ^ lax.shift_right_logical(h, 16)
        h = h * jnp.int32(_HASH_C1)
        h = h ^ lax.shift_right_logical(h, 13)
        h = h * jnp.int32(_HASH_C2)
        h = h ^ lax.shift_right_logical(h, 16)

        # keep with probability (1 - p): pure integer compare on the low 23 bits.
        k = h & jnp.int32(0x007FFFFF)
        thresh = jnp.int32(int(np.ceil(p * float(1 << 23))))
        scale = jnp.float32(1.0 / (1.0 - p))
        y = jnp.where(k >= thresh, y * scale, jnp.zeros_like(y))

    o_ref[...] = y.astype(o_ref.dtype)


# ---------------------------------------------------------------------------
# Wrapper
# ---------------------------------------------------------------------------
def _choose_tile_rows(S: int, bytes_per_row: int,
                      target_bytes: int = 2 * 1024 * 1024) -> int:
    """Pick an S-tile (~target_bytes of x per buffer, multiple of 8 rows)."""
    rows = max(1, target_bytes // max(1, bytes_per_row))
    rows = max(8, (rows // 8) * 8)
    return int(min(S, rows))


def positional_encoding_forward(x, pe, *, p: float = 0.1,
                                training: bool = False, seed: int = 0):
    """x: (S, B, D), pe: (max_len, 1, D). Returns dropout(x + pe[:S])."""
    assert 0.0 <= p < 1.0, "dropout p must be in [0, 1)"
    S, B, D = x.shape
    max_len = pe.shape[0]
    assert max_len >= S and pe.shape[1] == 1 and pe.shape[2] == D

    W = B * D
    x2 = x.reshape(S, W)                     # free contiguous view
    pe2 = pe.reshape(max_len, D)             # free contiguous view

    tS = _choose_tile_rows(S, W * x.dtype.itemsize)
    # Block-shape rule: last two dims must be multiples of (8, 128) or equal the
    # full array dims.  If tS is not a multiple of 8 it equals S, so slice pe
    # down to S rows so both block dims equal their full array dims.
    pe_in = pe2 if (tS % 8 == 0) else pe2[:S]

    grid = (pl.cdiv(S, tS),)
    seed_arr = jnp.array([seed], dtype=jnp.int32)      # scalar-prefetch arg (SMEM)
    kernel = functools.partial(_pe_dropout_kernel, p=p, training=training, batch=B)

    elem = S * W
    cost = pl.CostEstimate(
        flops=elem * (12 if (training and p > 0.0) else 1),
        transcendentals=0,
        bytes_accessed=2 * elem * x.dtype.itemsize + S * D * pe.dtype.itemsize,
    )

    out2 = pl.pallas_call(
        kernel,
        out_shape=jax.ShapeDtypeStruct((S, W), x.dtype),
        grid_spec=pltpu.PrefetchScalarGridSpec(
            num_scalar_prefetch=1,
            grid=grid,
            in_specs=[
                pl.BlockSpec((tS, W), lambda i, seed: (i, 0)),
                pl.BlockSpec((tS, D), lambda i, seed: (i, 0)),
            ],
            out_specs=pl.BlockSpec((tS, W), lambda i, seed: (i, 0)),
        ),
        compiler_params=pltpu.CompilerParams(
            dimension_semantics=("parallel",),
            vmem_limit_bytes=32 * 1024 * 1024,
        ),
        cost_estimate=cost,
    )(seed_arr, x2, pe_in)

    return out2.reshape(S, B, D)


# ---------------------------------------------------------------------------
# Demo / correctness check
# ---------------------------------------------------------------------------
if __name__ == "__main__":
    d_model = 32
    seq_len = 8
    batch = 2
    max_len = 5000
    p = 0.1

    pe = make_positional_encoding_table(d_model, max_len)

    key = jax.random.PRNGKey(0)
    x = jax.random.normal(key, (seq_len, batch, d_model), dtype=jnp.float32)

    # --- eval mode (dropout is identity): must match x + pe[:S] exactly ---
    out_eval = positional_encoding_forward(x, pe, p=p, training=False)
    out_eval = jax.block_until_ready(out_eval)
    ref_eval = x + pe[:seq_len]
    np.testing.assert_allclose(np.asarray(out_eval), np.asarray(ref_eval),
                               rtol=1e-6, atol=1e-6)

    # --- training mode (stochastic inverted dropout, in-kernel counter hash) ---
    # TODO(synk): dropout mask stream differs from torch.nn.Dropout's RNG; only
    # statistical equivalence (keep prob 1-p, scale 1/(1-p)) is preserved.
    out_train = positional_encoding_forward(x, pe, p=p, training=True, seed=1234)
    out_train = jax.block_until_ready(out_train)
    assert out_train.shape == (seq_len, batch, d_model)

    ot = np.asarray(out_train)
    rf = np.asarray(ref_eval)
    kept = ot != 0.0
    # surviving elements equal ref / (1 - p); dropped elements are exactly 0
    np.testing.assert_allclose(ot[kept], rf[kept] / (1.0 - p), rtol=1e-5, atol=1e-5)
    # drop fraction should be roughly p (very loose bound, just a sanity check)
    drop_frac = 1.0 - kept.mean()
    assert 0.0 <= drop_frac <= 0.5, f"unexpected drop fraction {drop_frac}"

    print("KERNEL_OK")
</pallas_src>

<mosaic_0001>
module attributes {stable_mosaic.version = 11 : i64} {
  func.func @_pe_dropout_kernel(%arg0: i32, %arg1: memref<1xi32, #tpu.memory_space<smem>>, %arg2: memref<8x64xf32, #tpu.memory_space<vmem>>, %arg3: memref<8x32xf32, #tpu.memory_space<vmem>>, %arg4: memref<8x64xf32, #tpu.memory_space<vmem>>) attributes {dimension_semantics = [#tpu.dimension_semantics<parallel>], iteration_bounds = array<i64: 1>, scalar_prefetch = 1 : i64, scratch_operands = 0 : i64, tpu.core_type = #tpu.core_type<tc>, window_params = [{transform_indices = @transform_0, window_bounds = array<i64: 8, 64>}, {transform_indices = @transform_1, window_bounds = array<i64: 8, 32>}, {transform_indices = @transform_2, window_bounds = array<i64: 8, 64>}]} {
    %c0 = arith.constant 0 : index
    %c0_0 = arith.constant 0 : index
    %0 = vector.load %arg2[%c0, %c0_0] : memref<8x64xf32, #tpu.memory_space<vmem>>, vector<8x64xf32>
    %c0_1 = arith.constant 0 : index
    %c0_2 = arith.constant 0 : index
    %1 = vector.load %arg3[%c0_1, %c0_2] : memref<8x32xf32, #tpu.memory_space<vmem>>, vector<8x32xf32>
    %2 = tpu.concatenate %1, %1 in 1 : vector<8x32xf32>, vector<8x32xf32> -> vector<8x64xf32>
    %3 = arith.addf %0, %2 : vector<8x64xf32>
    %c0_3 = arith.constant 0 : index
    %c0_4 = arith.constant 0 : index
    %4 = vector.load %arg4[%c0_3, %c0_4] : memref<8x64xf32, #tpu.memory_space<vmem>>, vector<8x64xf32>
    tpu.vector_store %arg4[%c0_3, %c0_4], %3 {strides = array<i32>} : memref<8x64xf32, #tpu.memory_space<vmem>>, vector<8x64xf32>,
    return
  }
  func.func @transform_0(%arg0: i32, %arg1: memref<1xi32, #tpu.memory_space<smem>>) -> (i32, i32) {
    %c0_i32 = arith.constant 0 : i32
    %c0_i32_0 = arith.constant 0 : i32
    return %arg0, %c0_i32 : i32, i32
  }
  func.func @transform_1(%arg0: i32, %arg1: memref<1xi32, #tpu.memory_space<smem>>) -> (i32, i32) {
    %c0_i32 = arith.constant 0 : i32
    %c0_i32_0 = arith.constant 0 : i32
    return %arg0, %c0_i32 : i32, i32
  }
  func.func @transform_2(%arg0: i32, %arg1: memref<1xi32, #tpu.memory_space<smem>>) -> (i32, i32) {
    %c0_i32 = arith.constant 0 : i32
    %c0_i32_0 = arith.constant 0 : i32
    return %arg0, %c0_i32 : i32, i32
  }
}

</mosaic_0001>

<llo_original>
// kernel: tpu_custom_call.1
$region0: #{tpu_custom_call.1}
  #allocation0 [shape = 'u32[]', space=smem, size = 0x4, offset = 0x4, fixed_abs, tag = 'smem constant byte address 0x4 - core index']
  #allocation1 [shape = 'u32[144,128]{1,0:T(1,128)}', space=vmem, size = 0x12000, scoped, tag = 'internal scratch']
  #allocation2 [shape = 's32[1]{0}', space=sflag, size = 0x4, scoped, tag = 'scoped memory for tpu_custom_call.1']
  #allocation3 [shape = 's32[1]{0:T(128)S(6)}', space=smem, size = 0x200, scoped, tag = 'prefetched SMEM operand 0']
  %s0 = inlined_call_operand.<no memory space> [shape: s32[1], index: 0, kind: input, shape index: {}]
  %s1 = inlined_call_operand.vmem [shape: f32[8,64], index: 1, kind: input, shape index: {}]
  %s2 = inlined_call_operand.vmem [shape: f32[5000,32], index: 2, kind: input, shape index: {}]
  %s3 = inlined_call_operand.hbm [shape: f32[8,64], index: 3, kind: output, shape index: {}]
  %s4 = sld [smem:[#allocation0]]
  $region18: #{tpu_custom_call.1} parent=0
    _
  %s6 = ssub.s32 1, %s4
  %s7 = scalar_select 0, %s6, %s4
  %8 = sst [smem:[#allocation3]] %s0
  $region1: #{tpu_custom_call.1} parent=0
    #allocation4 [shape = 'u8[4096]{0}', space=vmem, size = 0x1000, scoped, tag = 'output window, operand 0, single buffered']
    #allocation5 [shape = 's32[1]{0}', space=sflag, size = 0x4, scoped, tag = 'scoped memory for tpu_custom_call.1']
    %9 = vsyncpa [#allocation5], 0
    // Predicated region
    $region2: #{tpu_custom_call.1} parent=1 // pred_check
      _
    $region3: #{tpu_custom_call.1} parent=1 // pred_check_branch
      %11 = sbr.rel (0) target = $region5
    $region4: #{tpu_custom_call.1} parent=1 // pred_region
      _
    $region5: #{tpu_custom_call.1} parent=1 // pred_fallthru
      _
    // Predicated region
    $region6: #{tpu_custom_call.1} parent=1 // pred_check
      _
    $region7: #{tpu_custom_call.1} parent=1 // pred_check_branch
      %13 = sbr.rel (0) target = $region9
    $region8: #{tpu_custom_call.1} parent=1 // pred_region
      _
    $region9: #{tpu_custom_call.1} parent=1 // pred_fallthru
      _
    %v14 = vld [vmem:[%s1] sm:$0xff]
    %v15 = vld [vmem:[%s2] sm:$0xff]
    %17 = vrot.lane.b32.xlu0 %v15, 32
    %v18 = vpop.permute.xlu0 %17
    %vm20 = vcmask 261120
    %v21 = vsel %vm20, %v15, %v18
    %v22 = vadd.f32 %v14, %v21
    %vm23 = vcmask 523264
    %24 = vst.msk [vmem:[#allocation4] sm:$0xff] %vm23, %v22
    // Predicated region
    $region10: #{tpu_custom_call.1} parent=1 // pred_check
      _
    $region11: #{tpu_custom_call.1} parent=1 // pred_check_branch
      %26 = sbr.rel (0) target = $region13
    $region12: #{tpu_custom_call.1} parent=1 // pred_region
      %s28 = ssub.s32 128, 128
      %29 = vsyncadd [#allocation5], %s28
      %s31 = sshll.u32 [#allocation4], 4
      %s32 = int_to_ptr.vmem [resolvable:$true] %s31
      %34 = dma.vmem_to_hbm [thread:$0]  %s32, 128, %s3, [#allocation5]
    $region13: #{tpu_custom_call.1} parent=1 // pred_fallthru
      _
    // Predicated region
    $region14: #{tpu_custom_call.1} parent=1 // pred_check
      _
    $region15: #{tpu_custom_call.1} parent=1 // pred_check_branch
      %36 = sbr.rel (0) target = $region17
    $region16: #{tpu_custom_call.1} parent=1 // pred_region
      %37 = dma.done [#allocation5], 128
    $region17: #{tpu_custom_call.1} parent=1 // pred_fallthru
      _
    %38 = vsyncpa [#allocation5], 1

</llo_original>
